<compile_context>
chip_gen: v7x
topology: tpu7x:2x2x1
jax: 0.10.0
libtpu: 0.0.40
codegen_flags: <defaults>
</compile_context>

<pallas_src>
import functools

import jax
import jax.numpy as jnp
from jax import lax
from jax.experimental import pallas as pl
from jax.experimental.pallas import tpu as pltpu


_VMEM_TABLE_BUDGET_BYTES = 6 * 1024 * 1024   # hi+lo bf16 copies of the (folded) table
_MAX_ONEHOT_COLS = 8192                      # keep the per-tile one-hot build cheap


def _round_up(x, m):
    return ((x + m - 1) // m) * m


# --------------------------------------------------------------------------------------
# Fast path: table VMEM-resident, gather = one-hot matmul on the MXU.
# --------------------------------------------------------------------------------------

def _pos_enc_vmem_kernel(ids_ref, inv_freq_ref, tab_hi_ref, tab_lo_ref, out_ref, *, fold):
    # ids_ref     : (tile_m, fold) int32  -- `fold` consecutive token ids per output row
    # inv_freq_ref: (1, fold*C)    f32    -- 10000**(-arange(C)*2/C), tiled `fold` times
    # tab_hi/lo   : (fold*Vpad, fold*C) bf16 -- block-diag kron(eye(fold), table hi/lo)
    # out_ref     : (tile_m, fold*C) f32
    tile_m = out_ref.shape[0]
    vf = tab_hi_ref.shape[0]
    vpad = vf // fold

    ids = ids_ref[...]                                         # (tile_m, fold) int32
    col = lax.broadcasted_iota(jnp.int32, (tile_m, vf), 1)
    # One-hot selector: row i hits column f*vpad + ids[i, f] for each f.  ids < vocab
    # <= vpad, so each comparison is already confined to its own diagonal block.
    hit = ids[:, 0:1] == col
    for f in range(1, fold):                                   # static; fold in {1,2,4,...}
        hit = jnp.logical_or(hit, ids[:, f:f + 1] == (col - f * vpad))
    onehot = jnp.where(hit, 1.0, 0.0).astype(jnp.bfloat16)     # (tile_m, vf)

    # Exact gather on the MXU: one-hot x bf16 is exact, f32 accumulation of a single
    # nonzero term is exact, and hi + lo reconstructs the f32 table row.
    rows = jnp.dot(onehot, tab_hi_ref[...], preferred_element_type=jnp.float32)
    rows = rows + jnp.dot(onehot, tab_lo_ref[...], preferred_element_type=jnp.float32)

    out_ref[...] = jnp.sin(rows * inv_freq_ref[...])


def _choose_vmem_tile_m(n_rows, vf, cf):
    # Rough per-step VMEM bytes: ids (lane-padded int32, 2 buffers), one-hot (bf16 + f32
    # temps), gathered rows (f32), output (f32, 2 buffers).  Keep under ~8 MiB/step.
    def step_bytes(t):
        return t * (2 * 128 * 4 + 6 * vf + 12 * cf)

    tile = 1024
    while tile > 8 and step_bytes(tile) > 8 * 1024 * 1024:
        tile //= 2
    if n_rows <= tile:
        tile = max(8, _round_up(n_rows, 8))
    return tile


def _pos_enc_vmem_path(idx_flat, emb_table, C, fold):
    N = idx_flat.shape[0]
    V, _ = emb_table.shape
    Vpad = _round_up(V, 128)                  # zero-padded rows are never selected
    Vf, Cf = fold * Vpad, fold * C

    M = -(-N // fold)                         # folded output rows
    tile_m = _choose_vmem_tile_m(M, Vf, Cf)
    M_pad = _round_up(M, tile_m)
    num_tiles = M_pad // tile_m

    ids = jnp.zeros((M_pad * fold,), jnp.int32).at[:N].set(idx_flat)   # pad -> row 0
    ids = ids.reshape(M_pad, fold)

    # Split the table into exact bf16 hi/lo halves (lo == 0 for bf16 inputs).
    tab = emb_table
    if Vpad != V:
        tab = jnp.pad(tab, ((0, Vpad - V), (0, 0)))
    tab_f32 = tab.astype(jnp.float32)
    tab_hi = tab_f32.astype(jnp.bfloat16)
    tab_lo = (tab_f32 - tab_hi.astype(jnp.float32)).astype(jnp.bfloat16)
    if fold > 1:
        eye = jnp.eye(fold, dtype=jnp.bfloat16)
        tab_hi = jnp.kron(eye, tab_hi)        # (Vf, Cf) block-diagonal
        tab_lo = jnp.kron(eye, tab_lo)

    inv_freq = jnp.power(
        jnp.float32(10000.0),
        jnp.arange(C, dtype=jnp.float32) * jnp.float32(-2.0 / C))
    inv_freq = jnp.tile(inv_freq, fold).reshape(1, Cf)

    kernel = functools.partial(_pos_enc_vmem_kernel, fold=fold)
    out = pl.pallas_call(
        kernel,
        out_shape=jax.ShapeDtypeStruct((M_pad, Cf), jnp.float32),
        grid_spec=pltpu.PrefetchScalarGridSpec(
            num_scalar_prefetch=0,
            grid=(num_tiles,),
            in_specs=[
                pl.BlockSpec((tile_m, fold), lambda i: (i, 0)),   # token ids
                pl.BlockSpec((1, Cf), lambda i: (0, 0)),          # inv_freq (tiny)
                pl.BlockSpec((Vf, Cf), lambda i: (0, 0)),         # table hi (VMEM resident)
                pl.BlockSpec((Vf, Cf), lambda i: (0, 0)),         # table lo (VMEM resident)
            ],
            out_specs=pl.BlockSpec((tile_m, Cf), lambda i: (i, 0)),
        ),
        compiler_params=pltpu.CompilerParams(
            dimension_semantics=("parallel",),
            vmem_limit_bytes=32 * 1024 * 1024,
        ),
    )(ids, inv_freq, tab_hi, tab_lo)

    # (M_pad, fold*C) -> (M_pad*fold, C): pure row-major unfold, then drop pad rows.
    return out.reshape(M_pad * fold, C)[:N]


# --------------------------------------------------------------------------------------
# Fallback: large-vocab HBM row gather with manual DMAs (table never VMEM-resident).
# --------------------------------------------------------------------------------------

def _choose_hbm_tiling(n_rows, c, itemsize):
    if n_rows >= 512:
        tile_n = 256
    else:
        tile_n = max(8, _round_up(_round_up(n_rows, 16) // 2, 8))
    # Cap so gather buffer + double-buffered f32 output stay well inside scoped VMEM.
    row_bytes = c * (itemsize + 8)
    while tile_n > 8 and tile_n * row_bytes > 12 * 1024 * 1024:
        tile_n = max(8, (tile_n // 2 // 8) * 8)
    if tile_n % 64 == 0:
        chunk = 64
    elif tile_n % 32 == 0:
        chunk = 32
    else:
        chunk = 8
    return tile_n, chunk


def _pos_enc_hbm_kernel(idx_smem, inv_freq_ref, emb_hbm, out_ref, gbuf, sems, *,
                        tile_n, chunk, num_chunks):
    # idx_smem : (N_pad,) int32 in SMEM (scalar prefetch) -- flattened token ids
    # inv_freq : (1, C)  f32 in VMEM
    # emb_hbm  : (V, C)  table in HBM (memory_space=pl.ANY), native dtype
    # out_ref  : (tile_n, C) f32 VMEM output block
    # gbuf     : (tile_n, C) VMEM gather scratch (table dtype)
    # sems     : (num_chunks,) DMA semaphores, one per chunk of gathered rows
    base = pl.program_id(0) * tile_n
    C = out_ref.shape[1]

    # 1) Issue every row-gather DMA for this tile up front (unrolled so the LLO
    #    scheduler can pipeline SMEM id loads / address math / descriptor pushes).
    for c in range(num_chunks):                       # static; num_chunks is small
        def _issue(rr, carry, c=c):
            r = c * chunk + rr
            tok = idx_smem[base + r]
            pltpu.make_async_copy(emb_hbm.at[tok], gbuf.at[r], sems.at[c]).start()
            return carry
        lax.fori_loop(0, chunk, _issue, 0, unroll=8)

    # Hoisted once per tile (JAX does not CSE broadcast_in_dim across loop iterations).
    inv_b = jnp.broadcast_to(inv_freq_ref[...], (chunk, C))

    # 2) One chunk-sized wait per chunk, then compute that chunk while later chunks'
    #    DMAs stay in flight.  DMA semaphores count bytes, so one (chunk, C) descriptor
    #    on sems[c] accounts for exactly the `chunk` row copies issued on sems[c].
    for c in range(num_chunks):
        off = c * chunk                               # static offset
        pltpu.make_async_copy(
            emb_hbm.at[pl.ds(0, chunk)], gbuf.at[pl.ds(off, chunk)], sems.at[c]
        ).wait()
        rows = gbuf[pl.ds(off, chunk), :].astype(jnp.float32)   # native-dtype DMA, upcast here
        out_ref[pl.ds(off, chunk), :] = jnp.sin(rows * inv_b)
    # TODO(synk): cross-tile prefetch of the next tile's first chunk (or pl.Buffered(3)
    # on out_specs) would hide the first-chunk DMA latency of each grid step.


def _pos_enc_hbm_path(idx_flat, emb_table, C):
    N = idx_flat.shape[0]
    tile_n, chunk = _choose_hbm_tiling(N, C, emb_table.dtype.itemsize)
    num_chunks = tile_n // chunk
    n_pad = _round_up(N, tile_n)
    num_tiles = n_pad // tile_n

    if n_pad != N:
        idx_flat = jnp.pad(idx_flat, (0, n_pad - N))   # pad rows gather row 0, sliced off

    inv_freq = jnp.power(
        jnp.float32(10000.0),
        jnp.arange(C, dtype=jnp.float32) * jnp.float32(-2.0 / C)).reshape(1, C)

    kernel = functools.partial(
        _pos_enc_hbm_kernel, tile_n=tile_n, chunk=chunk, num_chunks=num_chunks)

    out = pl.pallas_call(
        kernel,
        out_shape=jax.ShapeDtypeStruct((n_pad, C), jnp.float32),
        grid_spec=pltpu.PrefetchScalarGridSpec(
            num_scalar_prefetch=1,
            grid=(num_tiles,),
            in_specs=[
                pl.BlockSpec((1, C), lambda i, idx_ref: (0, 0)),   # inv_freq (tiny, VMEM)
                pl.BlockSpec(memory_space=pl.ANY),                 # table stays in HBM
            ],
            out_specs=pl.BlockSpec((tile_n, C), lambda i, idx_ref: (i, 0)),
            scratch_shapes=[
                pltpu.VMEM((tile_n, C), emb_table.dtype),          # gather buffer (native dtype)
                pltpu.SemaphoreType.DMA((num_chunks,)),            # per-chunk completion sems
            ],
        ),
        compiler_params=pltpu.CompilerParams(
            dimension_semantics=("parallel",),
            vmem_limit_bytes=32 * 1024 * 1024,
        ),
    )(idx_flat, inv_freq, emb_table)

    return out[:N]


# --------------------------------------------------------------------------------------
# Public wrapper.
# --------------------------------------------------------------------------------------

def positional_encoding(idx, emb_table, B, T, C, *, force_hbm_gather=False):
    """sin(emb_table[idx] * 10000**(-arange(C)*2/C)) -> (B*T, C) float32."""
    N = B * T
    V, C_tab = emb_table.shape
    assert C_tab == C and idx.size == N

    idx_flat = jnp.reshape(idx, (-1,)).astype(jnp.int32)

    # Lane-density fold: pack 128//C consecutive tokens per 128-lane output row.
    fold = 128 // C if (0 < C < 128 and 128 % C == 0) else 1
    Vpad = _round_up(V, 128)

    def _table_fits(f):
        return ((f * Vpad) * (f * C) * 4 <= _VMEM_TABLE_BUDGET_BYTES
                and f * Vpad <= _MAX_ONEHOT_COLS)

    if not force_hbm_gather:
        if _table_fits(fold):
            return _pos_enc_vmem_path(idx_flat, emb_table, C, fold)
        if fold > 1 and _table_fits(1):
            return _pos_enc_vmem_path(idx_flat, emb_table, C, 1)

    return _pos_enc_hbm_path(idx_flat, emb_table, C)


def _reference(idx, emb_table, B, T, C):
    pos_embedding = emb_table[idx.reshape(-1)].astype(jnp.float32)      # (B*T, C)
    freq = jnp.power(10000.0, jnp.arange(C, dtype=jnp.float32) * (2.0 / C))
    return jnp.sin(pos_embedding / freq)


if __name__ == "__main__":
    key = jax.random.PRNGKey(0)

    # Config 1: small shapes implied by the module (B=2, T=8, C=32, vocab=64).
    # C=32 exercises the lane-density fold (4 tokens per 128-lane output row).
    B, T, C, VOCAB = 2, 8, 32, 64
    k_emb, k_idx, key = jax.random.split(key, 3)
    emb_table = (0.02 * jax.random.normal(k_emb, (VOCAB, C))).astype(jnp.float32)
    idx = jax.random.randint(k_idx, (B, T), 0, VOCAB, dtype=jnp.int32)

    out = jax.block_until_ready(positional_encoding(idx, emb_table, B, T, C))
    ref = _reference(idx, emb_table, B, T, C)
    assert out.shape == (B * T, C)
    assert jnp.allclose(out, ref, atol=1e-5, rtol=1e-5), "config-1 mismatch vs reference"

    # Config 2: lane-dense C (=128), row count not a tile multiple, larger vocab.
    B2, T2, C2, VOCAB2 = 4, 130, 128, 512
    k_emb2, k_idx2, key = jax.random.split(key, 3)
    emb_table2 = (0.02 * jax.random.normal(k_emb2, (VOCAB2, C2))).astype(jnp.float32)
    idx2 = jax.random.randint(k_idx2, (B2, T2), 0, VOCAB2, dtype=jnp.int32)

    out2 = jax.block_until_ready(positional_encoding(idx2, emb_table2, B2, T2, C2))
    ref2 = _reference(idx2, emb_table2, B2, T2, C2)
    assert out2.shape == (B2 * T2, C2)
    assert jnp.allclose(out2, ref2, atol=1e-5, rtol=1e-5), "config-2 mismatch vs reference"

    # Config 3: exercise the large-vocab HBM-gather fallback path explicitly.
    B3, T3, C3, VOCAB3 = 2, 24, 128, 256
    k_emb3, k_idx3, key = jax.random.split(key, 3)
    emb_table3 = (0.02 * jax.random.normal(k_emb3, (VOCAB3, C3))).astype(jnp.float32)
    idx3 = jax.random.randint(k_idx3, (B3, T3), 0, VOCAB3, dtype=jnp.int32)

    out3 = jax.block_until_ready(
        positional_encoding(idx3, emb_table3, B3, T3, C3, force_hbm_gather=True))
    ref3 = _reference(idx3, emb_table3, B3, T3, C3)
    assert out3.shape == (B3 * T3, C3)
    assert jnp.allclose(out3, ref3, atol=1e-5, rtol=1e-5), "config-3 (HBM path) mismatch"

    print("KERNEL_OK")
</pallas_src>

<mosaic_0001>
module attributes {stable_mosaic.version = 11 : i64} {
  func.func @_pos_enc_vmem_kernel(%arg0: i32, %arg1: memref<8x4xi32, #tpu.memory_space<vmem>>, %arg2: memref<1x128xf32, #tpu.memory_space<vmem>>, %arg3: memref<512x128xbf16, #tpu.memory_space<vmem>>, %arg4: memref<512x128xbf16, #tpu.memory_space<vmem>>, %arg5: memref<8x128xf32, #tpu.memory_space<vmem>>) attributes {dimension_semantics = [#tpu.dimension_semantics<parallel>], iteration_bounds = array<i64: 1>, scalar_prefetch = 0 : i64, scratch_operands = 0 : i64, tpu.core_type = #tpu.core_type<tc>, window_params = [{transform_indices = @transform_0, window_bounds = array<i64: 8, 4>}, {pipeline_mode = #tpu.pipeline_mode<synchronous>, transform_indices = @transform_1, window_bounds = array<i64: 1, 128>}, {pipeline_mode = #tpu.pipeline_mode<synchronous>, transform_indices = @transform_2, window_bounds = array<i64: 512, 128>}, {pipeline_mode = #tpu.pipeline_mode<synchronous>, transform_indices = @transform_3, window_bounds = array<i64: 512, 128>}, {transform_indices = @transform_4, window_bounds = array<i64: 8, 128>}]} {
    %c0 = arith.constant 0 : index
    %c0_0 = arith.constant 0 : index
    %0 = vector.load %arg1[%c0, %c0_0] : memref<8x4xi32, #tpu.memory_space<vmem>>, vector<8x4xi32>
    %1 = tpu.iota {dimensions = array<i32: 1>} : vector<8x512xi32>
    %2 = vector.extract_strided_slice %0 {offsets = [0, 0], sizes = [8, 1], strides = [1, 1]} : vector<8x4xi32> to vector<8x1xi32>
    %3 = vector.broadcast %2 : vector<8x1xi32> to vector<8x512xi32>
    %4 = arith.cmpi eq, %3, %1 : vector<8x512xi32>
    %5 = vector.extract_strided_slice %0 {offsets = [0, 1], sizes = [8, 1], strides = [1, 1]} : vector<8x4xi32> to vector<8x1xi32>
    %c128_i32 = arith.constant 128 : i32
    %6 = vector.broadcast %c128_i32 : i32 to vector<8x512xi32>
    %7 = arith.subi %1, %6 : vector<8x512xi32>
    %8 = vector.broadcast %5 : vector<8x1xi32> to vector<8x512xi32>
    %9 = arith.cmpi eq, %8, %7 : vector<8x512xi32>
    %10 = arith.ori %4, %9 : vector<8x512xi1>
    %11 = vector.extract_strided_slice %0 {offsets = [0, 2], sizes = [8, 1], strides = [1, 1]} : vector<8x4xi32> to vector<8x1xi32>
    %c256_i32 = arith.constant 256 : i32
    %12 = vector.broadcast %c256_i32 : i32 to vector<8x512xi32>
    %13 = arith.subi %1, %12 : vector<8x512xi32>
    %14 = vector.broadcast %11 : vector<8x1xi32> to vector<8x512xi32>
    %15 = arith.cmpi eq, %14, %13 : vector<8x512xi32>
    %16 = arith.ori %10, %15 : vector<8x512xi1>
    %17 = vector.extract_strided_slice %0 {offsets = [0, 3], sizes = [8, 1], strides = [1, 1]} : vector<8x4xi32> to vector<8x1xi32>
    %c384_i32 = arith.constant 384 : i32
    %18 = vector.broadcast %c384_i32 : i32 to vector<8x512xi32>
    %19 = arith.subi %1, %18 : vector<8x512xi32>
    %20 = vector.broadcast %17 : vector<8x1xi32> to vector<8x512xi32>
    %21 = arith.cmpi eq, %20, %19 : vector<8x512xi32>
    %22 = arith.ori %16, %21 : vector<8x512xi1>
    %cst = arith.constant 1.000000e+00 : f32
    %cst_1 = arith.constant 0.000000e+00 : f32
    %23 = vector.broadcast %cst : f32 to vector<8x512xf32>
    %24 = vector.broadcast %cst_1 : f32 to vector<8x512xf32>
    %25 = arith.select %22, %23, %24 : vector<8x512xi1>, vector<8x512xf32>
    %26 = arith.truncf %25 : vector<8x512xf32> to vector<8x512xbf16>
    %c0_2 = arith.constant 0 : index
    %c0_3 = arith.constant 0 : index
    %27 = vector.load %arg3[%c0_2, %c0_3] : memref<512x128xbf16, #tpu.memory_space<vmem>>, vector<512x128xbf16>
    %cst_4 = arith.constant dense<0.000000e+00> : vector<8x128xf32>
    %28 = tpu.matmul %26, %27, %cst_4 {dimension_numbers = #tpu.dot_dimension_numbers<[1], [0], [0], [1], [0, 0, 1, 1], [], []>} : vector<8x512xbf16>, vector<512x128xbf16>, vector<8x128xf32> -> vector<8x128xf32>
    %c0_5 = arith.constant 0 : index
    %c0_6 = arith.constant 0 : index
    %29 = vector.load %arg4[%c0_5, %c0_6] : memref<512x128xbf16, #tpu.memory_space<vmem>>, vector<512x128xbf16>
    %cst_7 = arith.constant dense<0.000000e+00> : vector<8x128xf32>
    %30 = tpu.matmul %26, %29, %cst_7 {dimension_numbers = #tpu.dot_dimension_numbers<[1], [0], [0], [1], [0, 0, 1, 1], [], []>} : vector<8x512xbf16>, vector<512x128xbf16>, vector<8x128xf32> -> vector<8x128xf32>
    %31 = arith.addf %28, %30 : vector<8x128xf32>
    %c0_8 = arith.constant 0 : index
    %c0_9 = arith.constant 0 : index
    %32 = vector.load %arg2[%c0_8, %c0_9] : memref<1x128xf32, #tpu.memory_space<vmem>>, vector<1x128xf32>
    %33 = vector.broadcast %32 : vector<1x128xf32> to vector<8x128xf32>
    %34 = arith.mulf %31, %33 : vector<8x128xf32>
    %35 = math.sin %34 : vector<8x128xf32>
    %c0_10 = arith.constant 0 : index
    %c0_11 = arith.constant 0 : index
    %36 = vector.load %arg5[%c0_10, %c0_11] : memref<8x128xf32, #tpu.memory_space<vmem>>, vector<8x128xf32>
    tpu.vector_store %arg5[%c0_10, %c0_11], %35 {strides = array<i32>} : memref<8x128xf32, #tpu.memory_space<vmem>>, vector<8x128xf32>,
    return
  }
  func.func @transform_0(%arg0: i32) -> (i32, i32) {
    %c0_i32 = arith.constant 0 : i32
    %c0_i32_0 = arith.constant 0 : i32
    return %arg0, %c0_i32 : i32, i32
  }
  func.func @transform_1(%arg0: i32) -> (i32, i32) {
    %c0_i32 = arith.constant 0 : i32
    %c0_i32_0 = arith.constant 0 : i32
    %c0_i32_1 = arith.constant 0 : i32
    return %c0_i32, %c0_i32_0 : i32, i32
  }
  func.func @transform_2(%arg0: i32) -> (i32, i32) {
    %c0_i32 = arith.constant 0 : i32
    %c0_i32_0 = arith.constant 0 : i32
    %c0_i32_1 = arith.constant 0 : i32
    return %c0_i32, %c0_i32_0 : i32, i32
  }
  func.func @transform_3(%arg0: i32) -> (i32, i32) {
    %c0_i32 = arith.constant 0 : i32
    %c0_i32_0 = arith.constant 0 : i32
    %c0_i32_1 = arith.constant 0 : i32
    return %c0_i32, %c0_i32_0 : i32, i32
  }
  func.func @transform_4(%arg0: i32) -> (i32, i32) {
    %c0_i32 = arith.constant 0 : i32
    %c0_i32_0 = arith.constant 0 : i32
    return %arg0, %c0_i32 : i32, i32
  }
}

</mosaic_0001>

<llo_original>
// kernel: tpu_custom_call.1
$region0: #{tpu_custom_call.1}
  #allocation0 [shape = 'u32[]', space=smem, size = 0x4, offset = 0x4, fixed_abs, tag = 'smem constant byte address 0x4 - core index']
  #allocation1 [shape = 'u32[144,128]{1,0:T(1,128)}', space=vmem, size = 0x12000, scoped, tag = 'internal scratch']
  %s0 = inlined_call_operand.vmem [shape: s32[8,4], index: 0, kind: input, shape index: {}]
  %s1 = inlined_call_operand.vmem [shape: f32[1,128], index: 1, kind: input, shape index: {}]
  %s2 = inlined_call_operand.hbm [shape: bf16[512,128], index: 2, kind: input, shape index: {}]
  %s3 = inlined_call_operand.hbm [shape: bf16[512,128], index: 3, kind: input, shape index: {}]
  %s4 = inlined_call_operand.hbm [shape: f32[8,128], index: 4, kind: output, shape index: {}]
  %s5 = sld [smem:[#allocation0]]
  $region34: #{tpu_custom_call.1} parent=0
    _
  %s7 = ssub.s32 1, %s5
  %s8 = scalar_select 0, %s7, %s5
  $region1: #{tpu_custom_call.1} parent=0
    #allocation2 [shape = 'u8[131072]{0}', space=vmem, size = 0x20000, scoped, tag = 'input window, operand 2, single buffered']
    #allocation3 [shape = 's32[1]{0}', space=sflag, size = 0x4, scoped, tag = 'scoped memory for tpu_custom_call.1']
    #allocation4 [shape = 's32[1]{0}', space=sflag, size = 0x4, scoped, tag = 'scoped memory for tpu_custom_call.1']
    #allocation5 [shape = 'u8[131072]{0}', space=vmem, size = 0x20000, scoped, tag = 'input window, operand 3, single buffered']
    #allocation6 [shape = 's32[1]{0}', space=sflag, size = 0x4, scoped, tag = 'scoped memory for tpu_custom_call.1']
    #allocation7 [shape = 'u8[4096]{0}', space=vmem, size = 0x1000, scoped, tag = 'output window, operand 0, single buffered']
    %9 = vsyncpa [#allocation3], 0
    %10 = vsyncpa [#allocation6], 0
    %11 = vsyncpa [#allocation4], 0
    // Predicated region
    $region2: #{tpu_custom_call.1} parent=1 // pred_check
      _
    $region3: #{tpu_custom_call.1} parent=1 // pred_check_branch
      %13 = sbr.rel (0) target = $region5
    $region4: #{tpu_custom_call.1} parent=1 // pred_region
      _
    $region5: #{tpu_custom_call.1} parent=1 // pred_fallthru
      _
    // Predicated region
    $region6: #{tpu_custom_call.1} parent=1 // pred_check
      _
    $region7: #{tpu_custom_call.1} parent=1 // pred_check_branch
      %15 = sbr.rel (0) target = $region9
    $region8: #{tpu_custom_call.1} parent=1 // pred_region
      _
    $region9: #{tpu_custom_call.1} parent=1 // pred_fallthru
      _
    // Predicated region
    $region10: #{tpu_custom_call.1} parent=1 // pred_check
      _
    $region11: #{tpu_custom_call.1} parent=1 // pred_check_branch
      %17 = sbr.rel (0) target = $region13
    $region12: #{tpu_custom_call.1} parent=1 // pred_region
      %s19 = ssub.s32 4096, 4096
      %20 = vsyncadd [#allocation3], %s19
      %s21 = sshll.u32 [#allocation2], 4
      %s22 = int_to_ptr.vmem [resolvable:$true] %s21
      %27 = dma.hbm_to_vmem [thread:$0]  %s2, 4096, %s22, [#allocation3], 64, 64, 4
    $region13: #{tpu_custom_call.1} parent=1 // pred_fallthru
      _
    // Predicated region
    $region14: #{tpu_custom_call.1} parent=1 // pred_check
      _
    $region15: #{tpu_custom_call.1} parent=1 // pred_check_branch
      %29 = sbr.rel (0) target = $region17
    $region16: #{tpu_custom_call.1} parent=1 // pred_region
      %s31 = ssub.s32 4096, 4096
      %32 = vsyncadd [#allocation6], %s31
      %s33 = sshll.u32 [#allocation5], 4
      %s34 = int_to_ptr.vmem [resolvable:$true] %s33
      %39 = dma.hbm_to_vmem [thread:$0]  %s3, 4096, %s34, [#allocation6], 64, 64, 4
    $region17: #{tpu_custom_call.1} parent=1 // pred_fallthru
      _
    // Predicated region
    $region18: #{tpu_custom_call.1} parent=1 // pred_check
      _
    $region19: #{tpu_custom_call.1} parent=1 // pred_check_branch
      %41 = sbr.rel (0) target = $region21
    $region20: #{tpu_custom_call.1} parent=1 // pred_region
      %42 = dma.done [#allocation3], 4096
    $region21: #{tpu_custom_call.1} parent=1 // pred_fallthru
      _
    // Predicated region
    $region22: #{tpu_custom_call.1} parent=1 // pred_check
      _
    $region23: #{tpu_custom_call.1} parent=1 // pred_check_branch
      %44 = sbr.rel (0) target = $region25
    $region24: #{tpu_custom_call.1} parent=1 // pred_region
      %45 = dma.done [#allocation6], 4096
    $region25: #{tpu_custom_call.1} parent=1 // pred_fallthru
      _
    %v47 = vld [vmem:[%s0] sm:$0xff]
    %v48 = vlaneseq
    %v49 = vand.u32 %v48, 127
    %v50 = vadd.s32 %v49, 128
    %v51 = vadd.s32 %v49, 256
    %v52 = vadd.s32 %v49, 384
    %53 = vset.pattern.permute.xlu0 0
    %54 = vperm.xlu0 %53, %v47
    %v55 = vpop.permute.xlu0 %54
    %vm56 = vcmp.eq.s32.totalorder %v55, %v49
    %vm57 = vcmp.eq.s32.totalorder %v55, %v50
    %vm58 = vcmp.eq.s32.totalorder %v55, %v51
    %vm59 = vcmp.eq.s32.totalorder %v55, %v52
    %v60 = vsub.s32 %v49, 128
    %v61 = vsub.s32 %v51, 128
    %v62 = vsub.s32 %v52, 128
    %63 = vset.pattern.permute.xlu0 1
    %64 = vperm.xlu0 %63, %v47
    %v65 = vpop.permute.xlu0 %64
    %vm66 = vcmp.eq.s32.totalorder %v65, %v60
    %vm67 = vcmp.eq.s32.totalorder %v65, %v49
    %vm68 = vcmp.eq.s32.totalorder %v65, %v61
    %vm69 = vcmp.eq.s32.totalorder %v65, %v62
    %vm70 = vmor %vm56, %vm66
    %vm71 = vmor %vm57, %vm67
    %vm72 = vmor %vm58, %vm68
    %vm73 = vmor %vm59, %vm69
    %v74 = vsub.s32 %v49, 256
    %v75 = vsub.s32 %v50, 256
    %v76 = vsub.s32 %v52, 256
    %77 = vset.pattern.permute.xlu0 2
    %78 = vperm.xlu0 %77, %v47
    %v79 = vpop.permute.xlu0 %78
    %vm80 = vcmp.eq.s32.totalorder %v79, %v74
    %vm81 = vcmp.eq.s32.totalorder %v79, %v75
    %vm82 = vcmp.eq.s32.totalorder %v79, %v49
    %vm83 = vcmp.eq.s32.totalorder %v79, %v76
    %vm84 = vmor %vm70, %vm80
    %vm85 = vmor %vm71, %vm81
    %vm86 = vmor %vm72, %vm82
    %vm87 = vmor %vm73, %vm83
    %v88 = vsub.s32 %v49, 384
    %v89 = vsub.s32 %v50, 384
    %v90 = vsub.s32 %v51, 384
    %91 = vset.pattern.permute.xlu0 3
    %92 = vperm.xlu0 %91, %v47
    %v93 = vpop.permute.xlu0 %92
    %vm94 = vcmp.eq.s32.totalorder %v93, %v88
    %vm95 = vcmp.eq.s32.totalorder %v93, %v89
    %vm96 = vcmp.eq.s32.totalorder %v93, %v90
    %vm97 = vcmp.eq.s32.totalorder %v93, %v49
    %vm98 = vmor %vm84, %vm94
    %vm99 = vmor %vm85, %vm95
    %vm100 = vmor %vm86, %vm96
    %vm101 = vmor %vm87, %vm97
    %v102 = vsel %vm98, 1.0, 0.0
    %v103 = vsel %vm99, 1.0, 0.0
    %v104 = vsel %vm100, 1.0, 0.0
    %v105 = vsel %vm101, 1.0, 0.0
    %v106 = vpack.c.bf16 %v102, %v102
    %v107 = vpack.c.bf16 %v103, %v103
    %v108 = vpack.c.bf16 %v104, %v104
    %v109 = vpack.c.bf16 %v105, %v105
    %v110 = vld [vmem:[#allocation2] sm:$0xf]
    %v111 = vld [vmem:[#allocation2 + $0x4] sm:$0xf]
    %v112 = vld [vmem:[#allocation2 + $0x8] sm:$0xf]
    %v113 = vld [vmem:[#allocation2 + $0xc] sm:$0xf]
    %v114 = vld [vmem:[#allocation2 + $0x10] sm:$0xf]
    %v115 = vld [vmem:[#allocation2 + $0x14] sm:$0xf]
    %v116 = vld [vmem:[#allocation2 + $0x18] sm:$0xf]
    %v117 = vld [vmem:[#allocation2 + $0x1c] sm:$0xf]
    %v118 = vld [vmem:[#allocation2 + $0x20] sm:$0xf]
    %v119 = vld [vmem:[#allocation2 + $0x24] sm:$0xf]
    %v120 = vld [vmem:[#allocation2 + $0x28] sm:$0xf]
    %v121 = vld [vmem:[#allocation2 + $0x2c] sm:$0xf]
    %v122 = vld [vmem:[#allocation2 + $0x30] sm:$0xf]
    %v123 = vld [vmem:[#allocation2 + $0x34] sm:$0xf]
    %v124 = vld [vmem:[#allocation2 + $0x38] sm:$0xf]
    %v125 = vld [vmem:[#allocation2 + $0x3c] sm:$0xf]
    %v126 = vld [vmem:[#allocation2 + $0x40] sm:$0xf]
    %v127 = vld [vmem:[#allocation2 + $0x44] sm:$0xf]
    %v128 = vld [vmem:[#allocation2 + $0x48] sm:$0xf]
    %v129 = vld [vmem:[#allocation2 + $0x4c] sm:$0xf]
    %v130 = vld [vmem:[#allocation2 + $0x50] sm:$0xf]
    %v131 = vld [vmem:[#allocation2 + $0x54] sm:$0xf]
    %v132 = vld [vmem:[#allocation2 + $0x58] sm:$0xf]
    %v133 = vld [vmem:[#allocation2 + $0x5c] sm:$0xf]
    %v134 = vld [vmem:[#allocation2 + $0x60] sm:$0xf]
    %v135 = vld [vmem:[#allocation2 + $0x64] sm:$0xf]
    %v136 = vld [vmem:[#allocation2 + $0x68] sm:$0xf]
    %v137 = vld [vmem:[#allocation2 + $0x6c] sm:$0xf]
    %v138 = vld [vmem:[#allocation2 + $0x70] sm:$0xf]
    %v139 = vld [vmem:[#allocation2 + $0x74] sm:$0xf]
    %v140 = vld [vmem:[#allocation2 + $0x78] sm:$0xf]
    %v141 = vld [vmem:[#allocation2 + $0x7c] sm:$0xf]
    %v142 = vld [vmem:[#allocation2 + $0x80] sm:$0xf]
    %v143 = vld [vmem:[#allocation2 + $0x84] sm:$0xf]
    %v144 = vld [vmem:[#allocation2 + $0x88] sm:$0xf]
    %v145 = vld [vmem:[#allocation2 + $0x8c] sm:$0xf]
    %v146 = vld [vmem:[#allocation2 + $0x90] sm:$0xf]
    %v147 = vld [vmem:[#allocation2 + $0x94] sm:$0xf]
    %v148 = vld [vmem:[#allocation2 + $0x98] sm:$0xf]
    %v149 = vld [vmem:[#allocation2 + $0x9c] sm:$0xf]
    %v150 = vld [vmem:[#allocation2 + $0xa0] sm:$0xf]
    %v151 = vld [vmem:[#allocation2 + $0xa4] sm:$0xf]
    %v152 = vld [vmem:[#allocation2 + $0xa8] sm:$0xf]
    %v153 = vld [vmem:[#allocation2 + $0xac] sm:$0xf]
    %v154 = vld [vmem:[#allocation2 + $0xb0] sm:$0xf]
    %v155 = vld [vmem:[#allocation2 + $0xb4] sm:$0xf]
    %v156 = vld [vmem:[#allocation2 + $0xb8] sm:$0xf]
    %v157 = vld [vmem:[#allocation2 + $0xbc] sm:$0xf]
    %v158 = vld [vmem:[#allocation2 + $0xc0] sm:$0xf]
    %v159 = vld [vmem:[#allocation2 + $0xc4] sm:$0xf]
    %v160 = vld [vmem:[#allocation2 + $0xc8] sm:$0xf]
    %v161 = vld [vmem:[#allocation2 + $0xcc] sm:$0xf]
    %v162 = vld [vmem:[#allocation2 + $0xd0] sm:$0xf]
    %v163 = vld [vmem:[#allocation2 + $0xd4] sm:$0xf]
    %v164 = vld [vmem:[#allocation2 + $0xd8] sm:$0xf]
    %v165 = vld [vmem:[#allocation2 + $0xdc] sm:$0xf]
    %v166 = vld [vmem:[#allocation2 + $0xe0] sm:$0xf]
    %v167 = vld [vmem:[#allocation2 + $0xe4] sm:$0xf]
    %v168 = vld [vmem:[#allocation2 + $0xe8] sm:$0xf]
    %v169 = vld [vmem:[#allocation2 + $0xec] sm:$0xf]
    %v170 = vld [vmem:[#allocation2 + $0xf0] sm:$0xf]
    %v171 = vld [vmem:[#allocation2 + $0xf4] sm:$0xf]
    %v172 = vld [vmem:[#allocation2 + $0xf8] sm:$0xf]
    %v173 = vld [vmem:[#allocation2 + $0xfc] sm:$0xf]
    %v174 = vld [vmem:[#allocation5] sm:$0xf]
    %v175 = vld [vmem:[#allocation5 + $0x4] sm:$0xf]
    %v176 = vld [vmem:[#allocation5 + $0x8] sm:$0xf]
    %v177 = vld [vmem:[#allocation5 + $0xc] sm:$0xf]
    %v178 = vld [vmem:[#allocation5 + $0x10] sm:$0xf]
    %v179 = vld [vmem:[#allocation5 + $0x14] sm:$0xf]
    %v180 = vld [vmem:[#allocation5 + $0x18] sm:$0xf]
    %v181 = vld [vmem:[#allocation5 + $0x1c] sm:$0xf]
    %v182 = vld [vmem:[#allocation5 + $0x20] sm:$0xf]
    %v183 = vld [vmem:[#allocation5 + $0x24] sm:$0xf]
    %v184 = vld [vmem:[#allocation5 + $0x28] sm:$0xf]
    %v185 = vld [vmem:[#allocation5 + $0x2c] sm:$0xf]
    %v186 = vld [vmem:[#allocation5 + $0x30] sm:$0xf]
    %v187 = vld [vmem:[#allocation5 + $0x34] sm:$0xf]
    %v188 = vld [vmem:[#allocation5 + $0x38] sm:$0xf]
    %v189 = vld [vmem:[#allocation5 + $0x3c] sm:$0xf]
    %v190 = vld [vmem:[#allocation5 + $0x40] sm:$0xf]
    %v191 = vld [vmem:[#allocation5 + $0x44] sm:$0xf]
    %v192 = vld [vmem:[#allocation5 + $0x48] sm:$0xf]
    %v193 = vld [vmem:[#allocation5 + $0x4c] sm:$0xf]
    %v194 = vld [vmem:[#allocation5 + $0x50] sm:$0xf]
    %v195 = vld [vmem:[#allocation5 + $0x54] sm:$0xf]
    %v196 = vld [vmem:[#allocation5 + $0x58] sm:$0xf]
    %v197 = vld [vmem:[#allocation5 + $0x5c] sm:$0xf]
    %v198 = vld [vmem:[#allocation5 + $0x60] sm:$0xf]
    %v199 = vld [vmem:[#allocation5 + $0x64] sm:$0xf]
    %v200 = vld [vmem:[#allocation5 + $0x68] sm:$0xf]
    %v201 = vld [vmem:[#allocation5 + $0x6c] sm:$0xf]
    %v202 = vld [vmem:[#allocation5 + $0x70] sm:$0xf]
    %v203 = vld [vmem:[#allocation5 + $0x74] sm:$0xf]
    %v204 = vld [vmem:[#allocation5 + $0x78] sm:$0xf]
    %v205 = vld [vmem:[#allocation5 + $0x7c] sm:$0xf]
    %v206 = vld [vmem:[#allocation5 + $0x80] sm:$0xf]
    %v207 = vld [vmem:[#allocation5 + $0x84] sm:$0xf]
    %v208 = vld [vmem:[#allocation5 + $0x88] sm:$0xf]
    %v209 = vld [vmem:[#allocation5 + $0x8c] sm:$0xf]
    %v210 = vld [vmem:[#allocation5 + $0x90] sm:$0xf]
    %v211 = vld [vmem:[#allocation5 + $0x94] sm:$0xf]
    %v212 = vld [vmem:[#allocation5 + $0x98] sm:$0xf]
    %v213 = vld [vmem:[#allocation5 + $0x9c] sm:$0xf]
    %v214 = vld [vmem:[#allocation5 + $0xa0] sm:$0xf]
    %v215 = vld [vmem:[#allocation5 + $0xa4] sm:$0xf]
    %v216 = vld [vmem:[#allocation5 + $0xa8] sm:$0xf]
    %v217 = vld [vmem:[#allocation5 + $0xac] sm:$0xf]
    %v218 = vld [vmem:[#allocation5 + $0xb0] sm:$0xf]
    %v219 = vld [vmem:[#allocation5 + $0xb4] sm:$0xf]
    %v220 = vld [vmem:[#allocation5 + $0xb8] sm:$0xf]
    %v221 = vld [vmem:[#allocation5 + $0xbc] sm:$0xf]
    %v222 = vld [vmem:[#allocation5 + $0xc0] sm:$0xf]
    %v223 = vld [vmem:[#allocation5 + $0xc4] sm:$0xf]
    %v224 = vld [vmem:[#allocation5 + $0xc8] sm:$0xf]
    %v225 = vld [vmem:[#allocation5 + $0xcc] sm:$0xf]
    %v226 = vld [vmem:[#allocation5 + $0xd0] sm:$0xf]
    %v227 = vld [vmem:[#allocation5 + $0xd4] sm:$0xf]
    %v228 = vld [vmem:[#allocation5 + $0xd8] sm:$0xf]
    %v229 = vld [vmem:[#allocation5 + $0xdc] sm:$0xf]
    %v230 = vld [vmem:[#allocation5 + $0xe0] sm:$0xf]
    %v231 = vld [vmem:[#allocation5 + $0xe4] sm:$0xf]
    %v232 = vld [vmem:[#allocation5 + $0xe8] sm:$0xf]
    %v233 = vld [vmem:[#allocation5 + $0xec] sm:$0xf]
    %v234 = vld [vmem:[#allocation5 + $0xf0] sm:$0xf]
    %v235 = vld [vmem:[#allocation5 + $0xf4] sm:$0xf]
    %v236 = vld [vmem:[#allocation5 + $0xf8] sm:$0xf]
    %v237 = vld [vmem:[#allocation5 + $0xfc] sm:$0xf]
    %v302 = vunpack.c.l.b16 %v174
    %v303 = vunpack.c.l.b16 %v175
    %v304 = vunpack.c.l.b16 %v176
    %v305 = vunpack.c.l.b16 %v177
    %v306 = vunpack.c.l.b16 %v178
    %v307 = vunpack.c.l.b16 %v179
    %v308 = vunpack.c.l.b16 %v180
    %v309 = vunpack.c.l.b16 %v181
    %v310 = vunpack.c.l.b16 %v182
    %v311 = vunpack.c.l.b16 %v183
    %v312 = vunpack.c.l.b16 %v184
    %v313 = vunpack.c.l.b16 %v185
    %v314 = vunpack.c.l.b16 %v186
    %v315 = vunpack.c.l.b16 %v187
    %v316 = vunpack.c.l.b16 %v188
    %v317 = vunpack.c.l.b16 %v189
    %v318 = vunpack.c.l.b16 %v190
    %v319 = vunpack.c.l.b16 %v191
    %v320 = vunpack.c.l.b16 %v192
    %v321 = vunpack.c.l.b16 %v193
    %v322 = vunpack.c.l.b16 %v194
    %v323 = vunpack.c.l.b16 %v195
    %v324 = vunpack.c.l.b16 %v196
    %v325 = vunpack.c.l.b16 %v197
    %v326 = vunpack.c.l.b16 %v198
    %v327 = vunpack.c.l.b16 %v199
    %v328 = vunpack.c.l.b16 %v200
    %v329 = vunpack.c.l.b16 %v201
    %v330 = vunpack.c.l.b16 %v202
    %v331 = vunpack.c.l.b16 %v203
    %v332 = vunpack.c.l.b16 %v204
    %v333 = vunpack.c.l.b16 %v205
    %v334 = vunpack.c.l.b16 %v206
    %v335 = vunpack.c.l.b16 %v207
    %v336 = vunpack.c.l.b16 %v208
    %v337 = vunpack.c.l.b16 %v209
    %v338 = vunpack.c.l.b16 %v210
    %v339 = vunpack.c.l.b16 %v211
    %v340 = vunpack.c.l.b16 %v212
    %v341 = vunpack.c.l.b16 %v213
    %v342 = vunpack.c.l.b16 %v214
    %v343 = vunpack.c.l.b16 %v215
    %v344 = vunpack.c.l.b16 %v216
    %v345 = vunpack.c.l.b16 %v217
    %v346 = vunpack.c.l.b16 %v218
    %v347 = vunpack.c.l.b16 %v219
    %v348 = vunpack.c.l.b16 %v220
    %v349 = vunpack.c.l.b16 %v221
    %v350 = vunpack.c.l.b16 %v222
    %v351 = vunpack.c.l.b16 %v223
    %v352 = vunpack.c.l.b16 %v224
    %v353 = vunpack.c.l.b16 %v225
    %v354 = vunpack.c.l.b16 %v226
    %v355 = vunpack.c.l.b16 %v227
    %v356 = vunpack.c.l.b16 %v228
    %v357 = vunpack.c.l.b16 %v229
    %v358 = vunpack.c.l.b16 %v230
    %v359 = vunpack.c.l.b16 %v231
    %v360 = vunpack.c.l.b16 %v232
    %v361 = vunpack.c.l.b16 %v233
    %v362 = vunpack.c.l.b16 %v234
    %v363 = vunpack.c.l.b16 %v235
    %v364 = vunpack.c.l.b16 %v236
    %v365 = vunpack.c.l.b16 %v237
    %v366 = vpack.c.b16 %v303, %v302
    %v367 = vpack.c.b16 %v305, %v304
    %v368 = vpack.c.b16 %v307, %v306
    %v369 = vpack.c.b16 %v309, %v308
    %v370 = vpack.c.b16 %v311, %v310
    %v371 = vpack.c.b16 %v313, %v312
    %v372 = vpack.c.b16 %v315, %v314
    %v373 = vpack.c.b16 %v317, %v316
    %v374 = vpack.c.b16 %v319, %v318
    %v375 = vpack.c.b16 %v321, %v320
    %v376 = vpack.c.b16 %v323, %v322
    %v377 = vpack.c.b16 %v325, %v324
    %v378 = vpack.c.b16 %v327, %v326
    %v379 = vpack.c.b16 %v329, %v328
    %v380 = vpack.c.b16 %v331, %v330
    %v381 = vpack.c.b16 %v333, %v332
    %v382 = vpack.c.b16 %v335, %v334
    %v383 = vpack.c.b16 %v337, %v336
    %v384 = vpack.c.b16 %v339, %v338
    %v385 = vpack.c.b16 %v341, %v340
    %v386 = vpack.c.b16 %v343, %v342
    %v387 = vpack.c.b16 %v345, %v344
    %v388 = vpack.c.b16 %v347, %v346
    %v389 = vpack.c.b16 %v349, %v348
    %v390 = vpack.c.b16 %v351, %v350
    %v391 = vpack.c.b16 %v353, %v352
    %v392 = vpack.c.b16 %v355, %v354
    %v393 = vpack.c.b16 %v357, %v356
    %v394 = vpack.c.b16 %v359, %v358
    %v395 = vpack.c.b16 %v361, %v360
    %v396 = vpack.c.b16 %v363, %v362
    %v397 = vpack.c.b16 %v365, %v364
    %430 = vmatprep.subr.bf16.mxu0 0
    %431 = vmatpush1.bf16.msra.mxu0 %v366
    %432 = vmatprep.subr.bf16.mxu0 0
    %433 = vmatpush1.bf16.msra.mxu0 %v367
    %434 = vmatprep.subr.bf16.mxu0 0
    %435 = vmatpush1.bf16.msra.mxu0 %v368
    %436 = vmatprep.subr.bf16.mxu0 0
    %437 = vmatpush1.bf16.msra.mxu0 %v369
    %438 = vmatprep.subr.bf16.mxu0 0
    %439 = vmatpush1.bf16.msra.mxu0 %v370
    %440 = vmatprep.subr.bf16.mxu0 0
    %441 = vmatpush1.bf16.msra.mxu0 %v371
    %442 = vmatprep.subr.bf16.mxu0 0
    %443 = vmatpush1.bf16.msra.mxu0 %v372
    %444 = vmatprep.subr.bf16.mxu0 0
    %445 = vmatpush1.bf16.msra.mxu0 %v373
    %446 = vmatprep.subr.bf16.mxu0 0
    %447 = vmatpush1.bf16.msra.mxu0 %v374
    %448 = vmatprep.subr.bf16.mxu0 0
    %449 = vmatpush1.bf16.msra.mxu0 %v375
    %450 = vmatprep.subr.bf16.mxu0 0
    %451 = vmatpush1.bf16.msra.mxu0 %v376
    %452 = vmatprep.subr.bf16.mxu0 0
    %453 = vmatpush1.bf16.msra.mxu0 %v377
    %454 = vmatprep.subr.bf16.mxu0 0
    %455 = vmatpush1.bf16.msra.mxu0 %v378
    %456 = vmatprep.subr.bf16.mxu0 0
    %457 = vmatpush1.bf16.msra.mxu0 %v379
    %458 = vmatprep.subr.bf16.mxu0 0
    %459 = vmatpush1.bf16.msra.mxu0 %v380
    %460 = vmatprep.subr.bf16.mxu0 0
    %461 = vmatpush1.bf16.msra.mxu0 %v381
    %462 = vmatprep.mubr.bf16.mxu0 %v107
    %463 = vmatmul.mubr.bf16.gmra.mrb[0].mxu0 %v106
    %v464 = vpop.f32.mrb[0].mxu0
    %v465 = vadd.f32 0.0, %v464
    %v466 = vpop.f32.mrb[0].mxu0
    %v467 = vpop.f32.mrb[0].mxu0
    %v468 = vpop.f32.mrb[0].mxu0
    %469 = vdwg.mxu0
    %470 = vmatprep.subr.bf16.mxu0 0
    %471 = vmatpush1.bf16.msra.mxu0 %v382
    %472 = vmatprep.subr.bf16.mxu0 0
    %473 = vmatpush1.bf16.msra.mxu0 %v383
    %474 = vmatprep.subr.bf16.mxu0 0
    %475 = vmatpush1.bf16.msra.mxu0 %v384
    %476 = vmatprep.subr.bf16.mxu0 0
    %477 = vmatpush1.bf16.msra.mxu0 %v385
    %478 = vmatprep.subr.bf16.mxu0 0
    %479 = vmatpush1.bf16.msra.mxu0 %v386
    %480 = vmatprep.subr.bf16.mxu0 0
    %481 = vmatpush1.bf16.msra.mxu0 %v387
    %482 = vmatprep.subr.bf16.mxu0 0
    %483 = vmatpush1.bf16.msra.mxu0 %v388
    %484 = vmatprep.subr.bf16.mxu0 0
    %485 = vmatpush1.bf16.msra.mxu0 %v389
    %486 = vmatprep.subr.bf16.mxu0 0
    %487 = vmatpush1.bf16.msra.mxu0 %v390
    %488 = vmatprep.subr.bf16.mxu0 0
    %489 = vmatpush1.bf16.msra.mxu0 %v391
    %490 = vmatprep.subr.bf16.mxu0 0
    %491 = vmatpush1.bf16.msra.mxu0 %v392
    %492 = vmatprep.subr.bf16.mxu0 0
    %493 = vmatpush1.bf16.msra.mxu0 %v393
    %494 = vmatprep.subr.bf16.mxu0 0
    %495 = vmatpush1.bf16.msra.mxu0 %v394
    %496 = vmatprep.subr.bf16.mxu0 0
    %497 = vmatpush1.bf16.msra.mxu0 %v395
    %498 = vmatprep.subr.bf16.mxu0 0
    %499 = vmatpush1.bf16.msra.mxu0 %v396
    %500 = vmatprep.subr.bf16.mxu0 0
    %501 = vmatpush1.bf16.msra.mxu0 %v397
    %502 = vmatprep.mubr.bf16.mxu0 %v109
    %503 = vmatmul.mubr.bf16.gmra.mrb[0].mxu0 %v108
    %v504 = vpop.f32.mrb[0].mxu0
    %v505 = vadd.f32 %v465, %v504
    %v506 = vpop.f32.mrb[0].mxu0
    %v507 = vpop.f32.mrb[0].mxu0
    %v508 = vpop.f32.mrb[0].mxu0
    %509 = vdwg.mxu0
    %v574 = vunpack.c.l.b16 %v110
    %v575 = vunpack.c.l.b16 %v111
    %v576 = vunpack.c.l.b16 %v112
    %v577 = vunpack.c.l.b16 %v113
    %v578 = vunpack.c.l.b16 %v114
    %v579 = vunpack.c.l.b16 %v115
    %v580 = vunpack.c.l.b16 %v116
    %v581 = vunpack.c.l.b16 %v117
    %v582 = vunpack.c.l.b16 %v118
    %v583 = vunpack.c.l.b16 %v119
    %v584 = vunpack.c.l.b16 %v120
    %v585 = vunpack.c.l.b16 %v121
    %v586 = vunpack.c.l.b16 %v122
    %v587 = vunpack.c.l.b16 %v123
    %v588 = vunpack.c.l.b16 %v124
    %v589 = vunpack.c.l.b16 %v125
    %v590 = vunpack.c.l.b16 %v126
    %v591 = vunpack.c.l.b16 %v127
    %v592 = vunpack.c.l.b16 %v128
    %v593 = vunpack.c.l.b16 %v129
    %v594 = vunpack.c.l.b16 %v130
    %v595 = vunpack.c.l.b16 %v131
    %v596 = vunpack.c.l.b16 %v132
    %v597 = vunpack.c.l.b16 %v133
    %v598 = vunpack.c.l.b16 %v134
    %v599 = vunpack.c.l.b16 %v135
    %v600 = vunpack.c.l.b16 %v136
    %v601 = vunpack.c.l.b16 %v137
    %v602 = vunpack.c.l.b16 %v138
    %v603 = vunpack.c.l.b16 %v139
    %v604 = vunpack.c.l.b16 %v140
    %v605 = vunpack.c.l.b16 %v141
    %v606 = vunpack.c.l.b16 %v142
    %v607 = vunpack.c.l.b16 %v143
    %v608 = vunpack.c.l.b16 %v144
    %v609 = vunpack.c.l.b16 %v145
    %v610 = vunpack.c.l.b16 %v146
    %v611 = vunpack.c.l.b16 %v147
    %v612 = vunpack.c.l.b16 %v148
    %v613 = vunpack.c.l.b16 %v149
    %v614 = vunpack.c.l.b16 %v150
    %v615 = vunpack.c.l.b16 %v151
    %v616 = vunpack.c.l.b16 %v152
    %v617 = vunpack.c.l.b16 %v153
    %v618 = vunpack.c.l.b16 %v154
    %v619 = vunpack.c.l.b16 %v155
    %v620 = vunpack.c.l.b16 %v156
    %v621 = vunpack.c.l.b16 %v157
    %v622 = vunpack.c.l.b16 %v158
    %v623 = vunpack.c.l.b16 %v159
    %v624 = vunpack.c.l.b16 %v160
    %v625 = vunpack.c.l.b16 %v161
    %v626 = vunpack.c.l.b16 %v162
    %v627 = vunpack.c.l.b16 %v163
    %v628 = vunpack.c.l.b16 %v164
    %v629 = vunpack.c.l.b16 %v165
    %v630 = vunpack.c.l.b16 %v166
    %v631 = vunpack.c.l.b16 %v167
    %v632 = vunpack.c.l.b16 %v168
    %v633 = vunpack.c.l.b16 %v169
    %v634 = vunpack.c.l.b16 %v170
    %v635 = vunpack.c.l.b16 %v171
    %v636 = vunpack.c.l.b16 %v172
    %v637 = vunpack.c.l.b16 %v173
    %v638 = vpack.c.b16 %v575, %v574
    %v639 = vpack.c.b16 %v577, %v576
    %v640 = vpack.c.b16 %v579, %v578
    %v641 = vpack.c.b16 %v581, %v580
    %v642 = vpack.c.b16 %v583, %v582
    %v643 = vpack.c.b16 %v585, %v584
    %v644 = vpack.c.b16 %v587, %v586
    %v645 = vpack.c.b16 %v589, %v588
    %v646 = vpack.c.b16 %v591, %v590
    %v647 = vpack.c.b16 %v593, %v592
    %v648 = vpack.c.b16 %v595, %v594
    %v649 = vpack.c.b16 %v597, %v596
    %v650 = vpack.c.b16 %v599, %v598
    %v651 = vpack.c.b16 %v601, %v600
    %v652 = vpack.c.b16 %v603, %v602
    %v653 = vpack.c.b16 %v605, %v604
    %v654 = vpack.c.b16 %v607, %v606
    %v655 = vpack.c.b16 %v609, %v608
    %v656 = vpack.c.b16 %v611, %v610
    %v657 = vpack.c.b16 %v613, %v612
    %v658 = vpack.c.b16 %v615, %v614
    %v659 = vpack.c.b16 %v617, %v616
    %v660 = vpack.c.b16 %v619, %v618
    %v661 = vpack.c.b16 %v621, %v620
    %v662 = vpack.c.b16 %v623, %v622
    %v663 = vpack.c.b16 %v625, %v624
    %v664 = vpack.c.b16 %v627, %v626
    %v665 = vpack.c.b16 %v629, %v628
    %v666 = vpack.c.b16 %v631, %v630
    %v667 = vpack.c.b16 %v633, %v632
    %v668 = vpack.c.b16 %v635, %v634
    %v669 = vpack.c.b16 %v637, %v636
    %702 = vmatprep.subr.bf16.mxu0 0
    %703 = vmatpush1.bf16.msra.mxu0 %v638
    %704 = vmatprep.subr.bf16.mxu0 0
    %705 = vmatpush1.bf16.msra.mxu0 %v639
    %706 = vmatprep.subr.bf16.mxu0 0
    %707 = vmatpush1.bf16.msra.mxu0 %v640
    %708 = vmatprep.subr.bf16.mxu0 0
    %709 = vmatpush1.bf16.msra.mxu0 %v641
    %710 = vmatprep.subr.bf16.mxu0 0
    %711 = vmatpush1.bf16.msra.mxu0 %v642
    %712 = vmatprep.subr.bf16.mxu0 0
    %713 = vmatpush1.bf16.msra.mxu0 %v643
    %714 = vmatprep.subr.bf16.mxu0 0
    %715 = vmatpush1.bf16.msra.mxu0 %v644
    %716 = vmatprep.subr.bf16.mxu0 0
    %717 = vmatpush1.bf16.msra.mxu0 %v645
    %718 = vmatprep.subr.bf16.mxu0 0
    %719 = vmatpush1.bf16.msra.mxu0 %v646
    %720 = vmatprep.subr.bf16.mxu0 0
    %721 = vmatpush1.bf16.msra.mxu0 %v647
    %722 = vmatprep.subr.bf16.mxu0 0
    %723 = vmatpush1.bf16.msra.mxu0 %v648
    %724 = vmatprep.subr.bf16.mxu0 0
    %725 = vmatpush1.bf16.msra.mxu0 %v649
    %726 = vmatprep.subr.bf16.mxu0 0
    %727 = vmatpush1.bf16.msra.mxu0 %v650
    %728 = vmatprep.subr.bf16.mxu0 0
    %729 = vmatpush1.bf16.msra.mxu0 %v651
    %730 = vmatprep.subr.bf16.mxu0 0
    %731 = vmatpush1.bf16.msra.mxu0 %v652
    %732 = vmatprep.subr.bf16.mxu0 0
    %733 = vmatpush1.bf16.msra.mxu0 %v653
    %734 = vmatprep.mubr.bf16.mxu0 %v107
    %735 = vmatmul.mubr.bf16.gmra.mrb[0].mxu0 %v106
    %v736 = vpop.f32.mrb[0].mxu0
    %v737 = vadd.f32 %v505, %v736
    %v738 = vpop.f32.mrb[0].mxu0
    %v739 = vpop.f32.mrb[0].mxu0
    %v740 = vpop.f32.mrb[0].mxu0
    %741 = vdwg.mxu0
    %742 = vmatprep.subr.bf16.mxu0 0
    %743 = vmatpush1.bf16.msra.mxu0 %v654
    %744 = vmatprep.subr.bf16.mxu0 0
    %745 = vmatpush1.bf16.msra.mxu0 %v655
    %746 = vmatprep.subr.bf16.mxu0 0
    %747 = vmatpush1.bf16.msra.mxu0 %v656
    %748 = vmatprep.subr.bf16.mxu0 0
    %749 = vmatpush1.bf16.msra.mxu0 %v657
    %750 = vmatprep.subr.bf16.mxu0 0
    %751 = vmatpush1.bf16.msra.mxu0 %v658
    %752 = vmatprep.subr.bf16.mxu0 0
    %753 = vmatpush1.bf16.msra.mxu0 %v659
    %754 = vmatprep.subr.bf16.mxu0 0
    %755 = vmatpush1.bf16.msra.mxu0 %v660
    %756 = vmatprep.subr.bf16.mxu0 0
    %757 = vmatpush1.bf16.msra.mxu0 %v661
    %758 = vmatprep.subr.bf16.mxu0 0
    %759 = vmatpush1.bf16.msra.mxu0 %v662
    %760 = vmatprep.subr.bf16.mxu0 0
    %761 = vmatpush1.bf16.msra.mxu0 %v663
    %762 = vmatprep.subr.bf16.mxu0 0
    %763 = vmatpush1.bf16.msra.mxu0 %v664
    %764 = vmatprep.subr.bf16.mxu0 0
    %765 = vmatpush1.bf16.msra.mxu0 %v665
    %766 = vmatprep.subr.bf16.mxu0 0
    %767 = vmatpush1.bf16.msra.mxu0 %v666
    %768 = vmatprep.subr.bf16.mxu0 0
    %769 = vmatpush1.bf16.msra.mxu0 %v667
    %770 = vmatprep.subr.bf16.mxu0 0
    %771 = vmatpush1.bf16.msra.mxu0 %v668
    %772 = vmatprep.subr.bf16.mxu0 0
    %773 = vmatpush1.bf16.msra.mxu0 %v669
    %774 = vmatprep.mubr.bf16.mxu0 %v109
    %775 = vmatmul.mubr.bf16.gmra.mrb[0].mxu0 %v108
    %v776 = vpop.f32.mrb[0].mxu0
    %v777 = vadd.f32 %v737, %v776
    %v778 = vpop.f32.mrb[0].mxu0
    %v779 = vpop.f32.mrb[0].mxu0
    %v780 = vpop.f32.mrb[0].mxu0
    %781 = vdwg.mxu0
    %v782 = vld [vmem:[%s1] sm:$0x1]
    %v784 = vlaneseq
    %v785 = vshrl.u32 %v784, 7
    %v786 = vsub.s32 0, %v785
    %v787 = vrot.slane %v782, %v786
    %v789 = vmul.f32 %v777, %v787
    %v790 = vand.u32 2147483647, %v789
    %vm791 = vcmp.le.f32.partialorder %v790, 0.7853982
    %vm792 = vcmp.lt.s32.totalorder %v789, 0
    %v793 = vand.u32 %v789, 2139095040
    %v794 = vshrl.u32 %v793, 23
    %v795 = vsub.s32 %v794, 127
    %v796 = vand.u32 2147483647, %v789
    %v797 = vand.u32 %v796, 8388607
    %v798 = vor.u32 %v797, 8388608
    %v799 = vsub.s32 0, %v798
    %v800 = vadd.s32 %v795, 1
    %vm801 = vcmp.gt.s32.totalorder %v800, 0
    %v802 = vsel %vm801, %v800, 0
    %v803 = vshrl.u32 %v802, 5
    %v804 = vand.u32 %v802, 31
    %v805 = vsub.s32 32, %v804
    %v806 = vshrl.u32 683565275, %v805
    %v807 = vshll.u32 683565275, %v804
    %v808 = vshrl.u32 2475754826, %v805
    %v809 = vor.u32 %v807, %v808
    %v810 = vshll.u32 2475754826, %v804
    %v811 = vshrl.u32 2131351028, %v805
    %v812 = vor.u32 %v810, %v811
    %v813 = vshll.u32 2131351028, %v804
    %v814 = vshrl.u32 2102212464, %v805
    %v815 = vor.u32 %v813, %v814
    %v816 = vshll.u32 2102212464, %v804
    %v817 = vshrl.u32 920167782, %v805
    %v818 = vor.u32 %v816, %v817
    %v819 = vshll.u32 920167782, %v804
    %v820 = vshrl.u32 1326507024, %v805
    %v821 = vor.u32 %v819, %v820
    %vm822 = vcmp.lt.s32.totalorder %v803, 1
    %vm823 = vcmp.lt.s32.totalorder %v803, 2
    %vm824 = vcmp.lt.s32.totalorder %v803, 3
    %vm825 = vcmp.lt.s32.totalorder %v803, 4
    %v826 = vsel %vm822, %v806, %v809
    %v827 = vsel %vm825, %v815, 2102212464
    %v828 = vsel %vm824, %v812, %v827
    %v829 = vsel %vm823, %v826, %v828
    %v830 = vsel %vm822, %v809, %v812
    %v831 = vsel %vm825, %v818, 920167782
    %v832 = vsel %vm824, %v815, %v831
    %v833 = vsel %vm823, %v830, %v832
    %v834 = vsel %vm822, %v812, %v815
    %v835 = vsel %vm825, %v821, 1326507024
    %v836 = vsel %vm824, %v818, %v835
    %v837 = vsel %vm823, %v834, %v836
    %v838 = vshll.u32 %v798, 8
    %v839 = vmul.u32.u64.compose %v838, %v837
    %v840 = vextract.low.u32 %v839
    %v841 = vextract.high.u32 %v839
    %v842 = vmul.u32.u64.compose %v838, %v833
    %v843 = vextract.low.u32 %v842
    %v844 = vextract.high.u32 %v842
    %v845 = vmul.u32 %v838, %v829
    %v846 = vadd.s32 %v841, %v843
    %vm847 = vc.u32 %v841, %v843
    %v848 = vadd.s32 %v844, 1
    %v849 = vsel %vm847, %v848, %v844
    %v850 = vadd.s32 %v845, %v849
    %v851 = vadd.s32 %v850, 536870912
    %v852 = vshrl.u32 %v851, 30
    %v853 = vshll.u32 %v852, 30
    %v854 = vsub.s32 %v850, %v853
    %vm855 = vcmp.lt.s32.totalorder %v854, 0
    %v856 = vsub.s32 0, %v854
    %v857 = vsel %vm855, %v856, %v854
    %v858 = vclz %v857
    %v859 = vsub.s32 %v858, 2
    %vm860 = vcmp.gt.s32.totalorder 0, %v859
    %v861 = vsel %vm860, 0, %v859
    %v862 = vsub.s32 32, %v861
    %v863 = vshll.u32 %v854, %v861
    %v864 = vshrl.u32 %v846, %v862
    %v865 = vor.u32 %v863, %v864
    %v866 = vsub.s32 4294967266, %v861
    %v867 = vadd.s32 %v866, 127
    %v868 = vshll.u32 %v867, 23
    %v869 = vor.u32 4788187, %v868
    %v870 = vand.u32 2147483647, %v869
    %v872 = vcvt.s32.f32 %v865
    %v873 = vmul.f32 %v872, %v870
    %v874 = vxor.u32 %v873, 2147483648
    %v875 = vsel %vm792, %v874, %v873
    %v876 = vsub.s32 4, %v852
    %v877 = vsel %vm792, %v876, %v852
    %v878 = vsel %vm791, %v789, %v875
    %v879 = vsel %vm791, 0, %v877
    %v880 = vcosq.f32.pop %v878
    %v881 = vsinq.f32.pop %v878
    %vm882 = vweird.f32 %v789
    %v883 = vadd.s32 %v879, 3
    %v884 = vand.u32 %v883, 3
    %vm885 = vcmp.lt.s32.totalorder %v884, 2
    %vm886 = vcmp.eq.s32.totalorder %v884, 0
    %v887 = vxor.u32 %v881, 2147483648
    %v888 = vsel %vm886, %v880, %v887
    %vm889 = vcmp.eq.s32.totalorder %v884, 2
    %v890 = vxor.u32 %v880, 2147483648
    %v891 = vsel %vm889, %v890, %v881
    %v892 = vsel %vm885, %v888, %v891
    %v893 = vsel %vm882, nan, %v892
    %894 = vst [vmem:[#allocation7] sm:$0xff] %v893
    // Predicated region
    $region26: #{tpu_custom_call.1} parent=1 // pred_check
      _
    $region27: #{tpu_custom_call.1} parent=1 // pred_check_branch
      %896 = sbr.rel (0) target = $region29
    $region28: #{tpu_custom_call.1} parent=1 // pred_region
      %s898 = ssub.s32 128, 128
      %899 = vsyncadd [#allocation4], %s898
      %s901 = sshll.u32 [#allocation7], 4
      %s902 = int_to_ptr.vmem [resolvable:$true] %s901
      %904 = dma.vmem_to_hbm [thread:$0]  %s902, 128, %s4, [#allocation4]
    $region29: #{tpu_custom_call.1} parent=1 // pred_fallthru
      _
    // Predicated region
    $region30: #{tpu_custom_call.1} parent=1 // pred_check
      _
    $region31: #{tpu_custom_call.1} parent=1 // pred_check_branch
      %906 = sbr.rel (0) target = $region33
    $region32: #{tpu_custom_call.1} parent=1 // pred_region
      %907 = dma.done [#allocation4], 128
    $region33: #{tpu_custom_call.1} parent=1 // pred_fallthru
      _
    %908 = vsyncpa [#allocation3], 1
    %909 = vsyncpa [#allocation6], 1
    %910 = vsyncpa [#allocation4], 1

</llo_original>
